<compile_context>
chip_gen: v6e
topology: v6e:2x2x1
jax: 0.10.0
libtpu: 0.0.40
codegen_flags: <defaults>
</compile_context>

<pallas_src>
import functools

import jax
import jax.numpy as jnp
from jax.experimental import pallas as pl
from jax.experimental.pallas import tpu as pltpu


def downsample_kernel(x_ref, w_ref, b_ref, o_ref, *, l_out):
    """Fused pad + stride-2 k=3 Conv1d as one im2col matmul.

    x_ref : [R, 2C]   rows r = b*l_out + t, columns = [x[2t, :], x[2t+1, :]]
    w_ref : [3C, Co]  rows ordered (tap0 | tap1 | tap2) x channels
    b_ref : [1, Co]
    o_ref : [R, Co]
    """
    x = x_ref[...]                                   # [R, 2C]
    rows, c2 = x.shape
    c = c2 // 2

    even = x[:, :c]                                  # x[b, :, 2t]      (tap k=1)
    odd = x[:, c:]                                   # x[b, :, 2t+1]    (tap k=2)

    # tap k=0 reads padded[2t] = x[b, :, 2t-1] = odd sample of the previous
    # output position, and the left zero-pad when t == 0.
    prev = jnp.concatenate(
        [jnp.zeros((1, c), dtype=x.dtype), odd[: rows - 1, :]], axis=0)
    t_idx = jax.lax.broadcasted_iota(jnp.int32, (rows, c), 0) % l_out
    prev = jnp.where(t_idx > 0, prev, jnp.zeros_like(prev))   # zero at each t==0

    xcol = jnp.concatenate([prev, even, odd], axis=1)          # [R, 3C]

    y = jnp.dot(xcol, w_ref[...], preferred_element_type=jnp.float32)
    o_ref[...] = (y + b_ref[...]).astype(o_ref.dtype)


def downsample_forward(x, weight, bias, *, block_batch=128):
    """Downsample.forward with with_conv=True.

    x      : [B, C, L]   (float32)
    weight : [C_out, C_in, 3]   (torch Conv1d layout)
    bias   : [C_out]
    returns: [B, C_out, L_out],  L_out = floor((L - 1) / 2) + 1
    """
    B, C, L = x.shape
    C_out = weight.shape[0]

    # Right zero-pad to even length; for odd L this reproduces the conv's use
    # of the right-hand constant pad (the extra column is exactly the zero the
    # last k=2 tap would have read).
    if L % 2:
        x = jnp.pad(x, ((0, 0), (0, 0), (0, 1)))
        L += 1
    L_out = L // 2

    # Layout plumbing (wrapper side): channels-last, deinterleave even/odd
    # samples via a pure reshape -> row r = b*L_out + t holds [x[2t,:], x[2t+1,:]].
    x_flat = jnp.transpose(x, (0, 2, 1)).reshape(B * L_out, 2 * C)

    # Pack the conv weight as one [3C, C_out] slab matching the im2col column
    # order (tap0 | tap1 | tap2) x channel:  W_packed[k*C + c, o] = w[o, c, k].
    w_packed = jnp.transpose(weight, (2, 1, 0)).reshape(3 * C, C_out)
    b_row = bias.reshape(1, C_out)

    tb = min(block_batch, B)                 # whole batch elements per block
    grid = (pl.cdiv(B, tb),)
    rows_blk = tb * L_out

    kern = functools.partial(downsample_kernel, l_out=L_out)

    y_flat = pl.pallas_call(
        kern,
        out_shape=jax.ShapeDtypeStruct((B * L_out, C_out), x.dtype),
        grid_spec=pltpu.PrefetchScalarGridSpec(
            num_scalar_prefetch=0,
            grid=grid,
            in_specs=[
                pl.BlockSpec((rows_blk, 2 * C), lambda i: (i, 0)),   # activations
                pl.BlockSpec((3 * C, C_out), lambda i: (0, 0)),      # resident weight
                pl.BlockSpec((1, C_out), lambda i: (0, 0)),          # resident bias
            ],
            out_specs=pl.BlockSpec((rows_blk, C_out), lambda i: (i, 0)),
        ),
        compiler_params=pltpu.CompilerParams(
            dimension_semantics=("parallel",)),
        cost_estimate=pl.CostEstimate(
            flops=2 * B * L_out * (3 * C) * C_out,
            transcendentals=0,
            bytes_accessed=4 * (B * L_out * 2 * C + 3 * C * C_out
                                + C_out + B * L_out * C_out)),
    )(x_flat, w_packed, b_row)

    # Back to the PyTorch output layout [B, C_out, L_out].
    return jnp.transpose(y_flat.reshape(B, L_out, C_out), (0, 2, 1))


def reference_forward(x, weight, bias):
    """Pure-JAX reference replicating the PyTorch forward semantics."""
    y = jax.lax.conv_general_dilated(
        x, weight, window_strides=(2,), padding=[(1, 1)],
        dimension_numbers=("NCH", "OIH", "NCH"))
    return y + bias[None, :, None]


if __name__ == "__main__":
    B, C, L = 2, 4, 16                      # small shapes consistent with the module
    key = jax.random.PRNGKey(0)
    kx, kw, kb = jax.random.split(key, 3)

    x = jax.random.normal(kx, (B, C, L), dtype=jnp.float32)
    weight = 0.1 * jax.random.normal(kw, (C, C, 3), dtype=jnp.float32)   # Conv1d(C, C, 3)
    bias = 0.1 * jax.random.normal(kb, (C,), dtype=jnp.float32)

    out = downsample_forward(x, weight, bias)
    out = jax.block_until_ready(out)

    ref = reference_forward(x, weight, bias)
    assert out.shape == (B, C, L // 2), f"bad output shape {out.shape}"
    assert jnp.allclose(out, ref, atol=1e-5, rtol=1e-5), "mismatch vs reference"

    print("KERNEL_OK")
</pallas_src>

<mosaic_0001>
module attributes {stable_mosaic.version = 11 : i64} {
  func.func @downsample_kernel(%arg0: i32, %arg1: memref<16x8xf32, #tpu.memory_space<vmem>>, %arg2: memref<12x4xf32, #tpu.memory_space<vmem>>, %arg3: memref<1x4xf32, #tpu.memory_space<vmem>>, %arg4: memref<16x4xf32, #tpu.memory_space<vmem>>) attributes {dimension_semantics = [#tpu.dimension_semantics<parallel>], iteration_bounds = array<i64: 1>, scalar_prefetch = 0 : i64, scratch_operands = 0 : i64, tpu.core_type = #tpu.core_type<tc>, window_params = [{transform_indices = @transform_0, window_bounds = array<i64: 16, 8>}, {pipeline_mode = #tpu.pipeline_mode<synchronous>, transform_indices = @transform_1, window_bounds = array<i64: 12, 4>}, {pipeline_mode = #tpu.pipeline_mode<synchronous>, transform_indices = @transform_2, window_bounds = array<i64: 1, 4>}, {transform_indices = @transform_3, window_bounds = array<i64: 16, 4>}]} {
    %c0 = arith.constant 0 : index
    %c0_0 = arith.constant 0 : index
    %0 = vector.load %arg1[%c0, %c0_0] : memref<16x8xf32, #tpu.memory_space<vmem>>, vector<16x8xf32>
    %1 = vector.extract_strided_slice %0 {offsets = [0, 0], sizes = [16, 4], strides = [1, 1]} : vector<16x8xf32> to vector<16x4xf32>
    %2 = vector.extract_strided_slice %0 {offsets = [0, 4], sizes = [16, 4], strides = [1, 1]} : vector<16x8xf32> to vector<16x4xf32>
    %cst = arith.constant 0.000000e+00 : f32
    %3 = vector.broadcast %cst : f32 to vector<1x4xf32>
    %4 = vector.extract_strided_slice %2 {offsets = [0, 0], sizes = [15, 4], strides = [1, 1]} : vector<16x4xf32> to vector<15x4xf32>
    %5 = tpu.concatenate %3, %4 in 0 : vector<1x4xf32>, vector<15x4xf32> -> vector<16x4xf32>
    %6 = tpu.iota {dimensions = array<i32: 0>} : vector<16x4xi32>
    %c8_i32 = arith.constant 8 : i32
    %c0_i32 = arith.constant 0 : i32
    %7 = arith.cmpi eq, %c8_i32, %c0_i32 : i32
    %c1_i32 = arith.constant 1 : i32
    %8 = arith.select %7, %c1_i32, %c8_i32 : i32
    %9 = vector.broadcast %8 : i32 to vector<16x4xi32>
    %10 = arith.remsi %6, %9 : vector<16x4xi32>
    %c0_i32_1 = arith.constant 0 : i32
    %11 = vector.broadcast %c0_i32_1 : i32 to vector<16x4xi32>
    %12 = arith.cmpi ne, %10, %11 : vector<16x4xi32>
    %c0_i32_2 = arith.constant 0 : i32
    %13 = vector.broadcast %c0_i32_2 : i32 to vector<16x4xi32>
    %14 = arith.cmpi slt, %10, %13 : vector<16x4xi32>
    %c0_i32_3 = arith.constant 0 : i32
    %15 = arith.cmpi slt, %8, %c0_i32_3 : i32
    %16 = vector.broadcast %15 : i1 to vector<16x4xi1>
    %17 = vector.broadcast %16 : vector<16x4xi1> to vector<16x4xi1>
    %18 = arith.xori %14, %17 : vector<16x4xi1>
    %19 = arith.andi %18, %12 : vector<16x4xi1>
    %20 = vector.broadcast %8 : i32 to vector<16x4xi32>
    %21 = arith.addi %10, %20 : vector<16x4xi32>
    %22 = arith.select %19, %21, %10 : vector<16x4xi1>, vector<16x4xi32>
    %c0_i32_4 = arith.constant 0 : i32
    %23 = vector.broadcast %c0_i32_4 : i32 to vector<16x4xi32>
    %24 = arith.cmpi sgt, %22, %23 : vector<16x4xi32>
    %cst_5 = arith.constant 0.000000e+00 : f32
    %25 = vector.broadcast %cst_5 : f32 to vector<16x4xf32>
    %26 = arith.select %24, %5, %25 : vector<16x4xi1>, vector<16x4xf32>
    %27 = tpu.concatenate %26, %1, %2 in 1 : vector<16x4xf32>, vector<16x4xf32>, vector<16x4xf32> -> vector<16x12xf32>
    %c0_6 = arith.constant 0 : index
    %c0_7 = arith.constant 0 : index
    %28 = vector.load %arg2[%c0_6, %c0_7] : memref<12x4xf32, #tpu.memory_space<vmem>>, vector<12x4xf32>
    %cst_8 = arith.constant dense<0.000000e+00> : vector<16x4xf32>
    %29 = tpu.matmul %27, %28, %cst_8 {dimension_numbers = #tpu.dot_dimension_numbers<[1], [0], [0], [1], [0, 0, 1, 1], [], []>} : vector<16x12xf32>, vector<12x4xf32>, vector<16x4xf32> -> vector<16x4xf32>
    %c0_9 = arith.constant 0 : index
    %c0_10 = arith.constant 0 : index
    %30 = vector.load %arg3[%c0_9, %c0_10] : memref<1x4xf32, #tpu.memory_space<vmem>>, vector<1x4xf32>
    %31 = vector.broadcast %30 : vector<1x4xf32> to vector<16x4xf32>
    %32 = arith.addf %29, %31 : vector<16x4xf32>
    %c0_11 = arith.constant 0 : index
    %c0_12 = arith.constant 0 : index
    %33 = vector.load %arg4[%c0_11, %c0_12] : memref<16x4xf32, #tpu.memory_space<vmem>>, vector<16x4xf32>
    tpu.vector_store %arg4[%c0_11, %c0_12], %32 {strides = array<i32>} : memref<16x4xf32, #tpu.memory_space<vmem>>, vector<16x4xf32>,
    return
  }
  func.func @transform_0(%arg0: i32) -> (i32, i32) {
    %c0_i32 = arith.constant 0 : i32
    %c0_i32_0 = arith.constant 0 : i32
    return %arg0, %c0_i32 : i32, i32
  }
  func.func @transform_1(%arg0: i32) -> (i32, i32) {
    %c0_i32 = arith.constant 0 : i32
    %c0_i32_0 = arith.constant 0 : i32
    %c0_i32_1 = arith.constant 0 : i32
    return %c0_i32, %c0_i32_0 : i32, i32
  }
  func.func @transform_2(%arg0: i32) -> (i32, i32) {
    %c0_i32 = arith.constant 0 : i32
    %c0_i32_0 = arith.constant 0 : i32
    %c0_i32_1 = arith.constant 0 : i32
    return %c0_i32, %c0_i32_0 : i32, i32
  }
  func.func @transform_3(%arg0: i32) -> (i32, i32) {
    %c0_i32 = arith.constant 0 : i32
    %c0_i32_0 = arith.constant 0 : i32
    return %arg0, %c0_i32 : i32, i32
  }
}

</mosaic_0001>

<llo_original>
// kernel: tpu_custom_call.1
$region0: #{tpu_custom_call.1}
  #allocation0 [shape = 'u32[]', space=smem, size = 0x4, offset = 0x4, fixed_abs, tag = 'smem constant byte address 0x4 - core index']
  #allocation1 [shape = 'u32[144,128]{1,0:T(1,128)}', space=vmem, size = 0x12000, scoped, tag = 'internal scratch']
  %s0 = inlined_call_operand.vmem [shape: f32[16,8], index: 0, kind: input, shape index: {}]
  %s1 = inlined_call_operand.vmem [shape: f32[12,4], index: 1, kind: input, shape index: {}]
  %s2 = inlined_call_operand.vmem [shape: f32[1,4], index: 2, kind: input, shape index: {}]
  %s3 = inlined_call_operand.vmem [shape: f32[16,4], index: 3, kind: output, shape index: {}]
  %s4 = sld [smem:[#allocation0]]
  $region22: #{tpu_custom_call.1} parent=0
    _
  %s6 = ssub.s32 1, %s4
  %s7 = scalar_select 0, %s6, %s4
  // Predicated region
  $region2: #{tpu_custom_call.1} parent=0 // pred_check
    _
  $region3: #{tpu_custom_call.1} parent=0 // pred_check_branch
    %9 = sbr.rel (0) target = $region5
  $region4: #{tpu_custom_call.1} parent=0 // pred_region
    _
  $region5: #{tpu_custom_call.1} parent=0 // pred_fallthru
    _
  // Predicated region
  $region6: #{tpu_custom_call.1} parent=0 // pred_check
    _
  $region7: #{tpu_custom_call.1} parent=0 // pred_check_branch
    %11 = sbr.rel (0) target = $region9
  $region8: #{tpu_custom_call.1} parent=0 // pred_region
    _
  $region9: #{tpu_custom_call.1} parent=0 // pred_fallthru
    _
  // Predicated region
  $region10: #{tpu_custom_call.1} parent=0 // pred_check
    _
  $region11: #{tpu_custom_call.1} parent=0 // pred_check_branch
    %13 = sbr.rel (0) target = $region13
  $region12: #{tpu_custom_call.1} parent=0 // pred_region
    _
  $region13: #{tpu_custom_call.1} parent=0 // pred_fallthru
    _
  %v14 = vld [vmem:[%s0] sm:$0xff]
  %v15 = vld [vmem:[%s0 + $0x8] sm:$0xff]
  %vm18 = vcmask 1040384
  %v19 = vrot.slane %v14, 7
  %v20 = vrot.slane %v15, 7
  %v21 = vsel %vm18, %v19, %v20
  %22 = vrot.lane.b32.xlu0 %v19, 124
  %v23 = vpop.permute.xlu0 %22
  %24 = vrot.lane.b32.xlu0 %v21, 124
  %v25 = vpop.permute.xlu0 %24
  %v28 = vsel %vm18, 0.0, %v23
  %v29 = vlaneseq
  %v30 = vshrl.u32 %v29, 7
  %v31 = vadd.s32 %v30, 8
  %vm32 = vcmp.lt.s32.totalorder %v30, 0
  %v33 = vsub.s32 0, %v30
  %v34 = vsel %vm32, %v33, %v30
  %v35 = vshrl.u32 %v34, 3
  %v36 = vand.u32 %v34, 7
  %v37 = vsub.s32 0, %v36
  %v38 = vsel %vm32, %v37, %v36
  %vm39 = vcmp.lt.s32.totalorder %v31, 0
  %v40 = vsub.s32 0, %v31
  %v41 = vsel %vm39, %v40, %v31
  %v42 = vshrl.u32 %v41, 3
  %v43 = vand.u32 %v41, 7
  %v44 = vsub.s32 0, %v43
  %v45 = vsel %vm39, %v44, %v43
  %vm46 = vcmp.ne.s32.totalorder %v38, 0
  %vm47 = vcmp.ne.s32.totalorder %v45, 0
  %vm48 = vcmp.lt.s32.totalorder %v38, 0
  %vm49 = vcmp.lt.s32.totalorder %v45, 0
  %vm50 = vmand %vm48, %vm46
  %vm51 = vmand %vm49, %vm47
  %v52 = vadd.s32 %v38, 8
  %v53 = vadd.s32 %v45, 8
  %v54 = vsel %vm50, %v52, %v38
  %v55 = vsel %vm51, %v53, %v45
  %vm56 = vcmp.gt.s32.totalorder %v54, 0
  %vm57 = vcmp.gt.s32.totalorder %v55, 0
  %v58 = vsel %vm56, %v28, 0.0
  %v59 = vsel %vm57, %v25, 0.0
  %60 = vrot.lane.b32.xlu0 %v14, 4
  %v61 = vpop.permute.xlu0 %60
  %62 = vrot.lane.b32.xlu0 %v15, 4
  %v63 = vpop.permute.xlu0 %62
  %vm66 = vcmask 31744
  %v67 = vsel %vm66, %v58, %v61
  %v68 = vsel %vm66, %v59, %v63
  %vm69 = vcmask 64512
  %v70 = vsel %vm69, %v67, %v61
  %v71 = vsel %vm69, %v68, %v63
  %v72 = vld [vmem:[%s1] sm:$0xff]
  %v73 = vld [vmem:[%s1 + $0x8] sm:$0xf]
  %v74 = vld [vmem:[%s2] sm:$0x1]
  %v76 = vlaneseq
  %v77 = vshrl.u32 %v76, 7
  %v78 = vsub.s32 0, %v77
  %v79 = vrot.slane %v74, %v78
  %vm81 = vcmask 97280
  %v83 = vsel %vm81, %v70, 0
  %v86 = vsel %vm81, %v71, 0
  %vm88 = vcmask 1043456
  %v90 = vsel %vm88, %v73, 0
  %92 = vmatprep.subr.mxu0 0.0
  %93 = vmatpush1.msra.mxu0 0.0
  %94 = vmatprep.subr.mxu0 0.0
  %95 = vmatpush1.msra.mxu0 0.0
  %96 = vmatprep.subr.mxu0 0.0
  %97 = vmatpush1.msra.mxu0 0.0
  %98 = vmatprep.subr.mxu0 0.0
  %99 = vmatpush1.msra.mxu0 0.0
  %100 = vmatprep.subr.mxu0 0.0
  %101 = vmatpush1.msra.mxu0 0.0
  %102 = vmatprep.subr.mxu0 0.0
  %103 = vmatpush1.msra.mxu0 0.0
  %104 = vmatprep.subr.mxu0 0.0
  %105 = vmatpush1.msra.mxu0 0.0
  %106 = vmatprep.subr.mxu0 0.0
  %107 = vmatpush1.msra.mxu0 0.0
  %108 = vmatprep.subr.mxu0 0.0
  %109 = vmatpush1.msra.mxu0 0.0
  %110 = vmatprep.subr.mxu0 0.0
  %111 = vmatpush1.msra.mxu0 0.0
  %112 = vmatprep.subr.mxu0 0.0
  %113 = vmatpush1.msra.mxu0 0.0
  %114 = vmatprep.subr.mxu0 0.0
  %115 = vmatpush1.msra.mxu0 0.0
  %116 = vmatprep.subr.mxu0 0.0
  %117 = vmatpush1.msra.mxu0 0.0
  %118 = vmatprep.subr.mxu0 0.0
  %119 = vmatpush1.msra.mxu0 0.0
  %120 = vmatprep.subr.mxu0 0.0
  %121 = vmatpush1.msra.mxu0 %v90
  %122 = vmatprep.subr.mxu0 0.0
  %123 = vmatpush1.msra.mxu0 %v72
  %124 = vmatprep.subr.mxu0 0.0
  %125 = vmatpush2.msra.mxu0 0.0
  %126 = vmatprep.subr.mxu0 0.0
  %127 = vmatpush2.msra.mxu0 0.0
  %128 = vmatprep.subr.mxu0 0.0
  %129 = vmatpush2.msra.mxu0 0.0
  %130 = vmatprep.subr.mxu0 0.0
  %131 = vmatpush2.msra.mxu0 0.0
  %132 = vmatprep.subr.mxu0 0.0
  %133 = vmatpush2.msra.mxu0 0.0
  %134 = vmatprep.subr.mxu0 0.0
  %135 = vmatpush2.msra.mxu0 0.0
  %136 = vmatprep.subr.mxu0 0.0
  %137 = vmatpush2.msra.mxu0 0.0
  %138 = vmatprep.subr.mxu0 0.0
  %139 = vmatpush2.msra.mxu0 0.0
  %140 = vmatprep.subr.mxu0 0.0
  %141 = vmatpush2.msra.mxu0 0.0
  %142 = vmatprep.subr.mxu0 0.0
  %143 = vmatpush2.msra.mxu0 0.0
  %144 = vmatprep.subr.mxu0 0.0
  %145 = vmatpush2.msra.mxu0 0.0
  %146 = vmatprep.subr.mxu0 0.0
  %147 = vmatpush2.msra.mxu0 0.0
  %148 = vmatprep.subr.mxu0 0.0
  %149 = vmatpush2.msra.mxu0 0.0
  %150 = vmatprep.subr.mxu0 0.0
  %151 = vmatpush2.msra.mxu0 0.0
  %152 = vmatprep.subr.mxu0 0.0
  %153 = vmatpush2.msra.mxu0 0.0
  %154 = vmatprep.subr.mxu0 0.0
  %155 = vmatpush2.msra.mxu0 0.0
  %156 = vmatprep.mubr.f32.mxu0 0.0
  %157 = vmatmul.mubr.f32.gmra.mxu0 %v83
  %v158 = vpop.f32.mrf.mxu0
  %v159 = vadd.f32 %v79, %v158
  %v160 = vpop.f32.mrf.mxu0
  %161 = vmatprep.mubr.f32.mxu0 0.0
  %162 = vmatmul.mubr.f32.gmra.mxu0 %v86
  %v163 = vpop.f32.mrf.mxu0
  %v164 = vadd.f32 %v79, %v163
  %v165 = vpop.f32.mrf.mxu0
  %166 = vdwg.mxu0
  %167 = vst.msk [vmem:[%s3] sm:$0xff] %vm66, %v159
  %168 = vst.msk [vmem:[%s3 + $0x8] sm:$0xff] %vm66, %v164
  // Predicated region
  $region14: #{tpu_custom_call.1} parent=0 // pred_check
    _
  $region15: #{tpu_custom_call.1} parent=0 // pred_check_branch
    %170 = sbr.rel (0) target = $region17
  $region16: #{tpu_custom_call.1} parent=0 // pred_region
    _
  $region17: #{tpu_custom_call.1} parent=0 // pred_fallthru
    _
  // Predicated region
  $region18: #{tpu_custom_call.1} parent=0 // pred_check
    _
  $region19: #{tpu_custom_call.1} parent=0 // pred_check_branch
    %172 = sbr.rel (0) target = $region21
  $region20: #{tpu_custom_call.1} parent=0 // pred_region
    _
  $region21: #{tpu_custom_call.1} parent=0 // pred_fallthru
    _

</llo_original>
